<compile_context>
chip_gen: v7x
topology: tpu7x:2x2x1
jax: 0.10.0
libtpu: 0.0.40
codegen_flags: <defaults>
</compile_context>

<pallas_src>
import functools
import math

import jax
import jax.numpy as jnp
from jax import lax
from jax.experimental import pallas as pl
from jax.experimental.pallas import tpu as pltpu


def _round_up(x, m):
    return ((x + m - 1) // m) * m


def _wmse_kernel(x_ref, t_ref, o_ref, acc_ref, *, n_d_per, total_d, block_d,
                 mask_cols):
    """x_ref/t_ref: (TB, TD) input tiles (native dtype; boundary blocks may
    contain garbage in the out-of-range region).  o_ref: (TB, 128) lane-dense
    per-row partial SSE, written once at the last reduction step.
    acc_ref: (TB, 128) f32 scratch, resident across the innermost D axis."""
    j = pl.program_id(2)

    @pl.when(j == 0)
    def _():
        acc_ref[...] = jnp.zeros_like(acc_ref)

    diff = x_ref[...].astype(jnp.float32) - t_ref[...].astype(jnp.float32)
    if mask_cols:
        # Tail D-block: zero out-of-range columns BEFORE squaring/accumulating
        # (Pallas does not zero the out-of-range part of a boundary block).
        c = pl.program_id(1)
        d_start = (c * n_d_per + j) * block_d
        col = d_start + lax.broadcasted_iota(jnp.int32, diff.shape, 1)
        diff = jnp.where(col < total_d, diff, 0.0)
    d2 = diff * diff

    # Lane-resident accumulation: fold TD into 128-wide lane chunks with
    # static lane-aligned slices (pure VPU adds; no per-step cross-lane
    # reduce, no narrow masked stores).
    part = d2[:, 0:128]
    for k in range(1, block_d // 128):
        part = part + d2[:, k * 128:(k + 1) * 128]
    acc_ref[...] += part

    @pl.when(j == pl.num_programs(2) - 1)
    def _():
        o_ref[...] = acc_ref[...]


def _row_sq_sums(x2d, t2d):
    """Per-row sum of squared differences, sum_d (x[b,d]-t[b,d])^2 -> (B,) f32."""
    assert x2d.shape == t2d.shape
    B, D = x2d.shape
    itemsize = jnp.dtype(x2d.dtype).itemsize

    # Dtype-aware sublane packing (f32: 8, bf16: 16, int8/fp8: 32).
    pack = max(8, 32 // itemsize)
    TB = 256 if B >= 256 else min(_round_up(B, pack), 256)
    # ~16 KiB of lanes per row per step -> 4096 f32 / 8192 bf16 / 16384 int8.
    td_cap = max(128, 16384 // itemsize)
    TD = min(_round_up(D, 128), td_cap)

    n_b = pl.cdiv(B, TB)
    n_d_total = pl.cdiv(D, TD)
    # v7x second TensorCore: when there is only one B-block, split the D
    # reduction into 2 'parallel' halves (only when it splits evenly, so no
    # out-of-range block indices are ever generated).
    n_split = 2 if (n_b == 1 and n_d_total >= 2 and n_d_total % 2 == 0) else 1
    n_d_per = n_d_total // n_split
    Bp = n_b * TB
    mask_cols = (D % TD) != 0

    # Double-buffered inputs + output block buffers + accumulator scratch.
    vmem_needed = 2 * 2 * TB * TD * itemsize + 3 * TB * 128 * 4
    vmem_limit = int(min(40 * 2**20, max(vmem_needed + (4 << 20), 16 << 20)))

    kernel = functools.partial(
        _wmse_kernel, n_d_per=n_d_per, total_d=D, block_d=TD,
        mask_cols=mask_cols)

    out = pl.pallas_call(
        kernel,
        out_shape=jax.ShapeDtypeStruct((Bp, n_split * 128), jnp.float32),
        grid=(n_b, n_split, n_d_per),
        in_specs=[
            pl.BlockSpec((TB, TD), lambda i, c, j: (i, c * n_d_per + j)),
            pl.BlockSpec((TB, TD), lambda i, c, j: (i, c * n_d_per + j)),
        ],
        out_specs=pl.BlockSpec((TB, 128), lambda i, c, j: (i, c)),
        scratch_shapes=[pltpu.VMEM((TB, 128), jnp.float32)],
        compiler_params=pltpu.CompilerParams(
            dimension_semantics=("parallel", "parallel", "arbitrary"),
            vmem_limit_bytes=vmem_limit),
        cost_estimate=pl.CostEstimate(
            flops=3 * B * D,
            transcendentals=0,
            bytes_accessed=2 * B * D * itemsize + Bp * n_split * 128 * 4),
    )(x2d, t2d)

    # Discard garbage tail-B rows, reduce lane/split partials to per-row SSE.
    return jnp.sum(out[:B], axis=1)


def weighted_mse_metric(inp, tgt, weights=None, classes=None, scale=1.0):
    """JAX/Pallas equivalent of WeightedMSEMetric.forward.

    inp/tgt: (B, C, H, W).  weights: (num_classes,) buffer or None.
    classes: per-sample class indices (length B) or None.  scale: scalar."""
    assert inp.shape == tgt.shape
    B = inp.shape[0]
    D = math.prod(inp.shape[1:])
    # Reshape is a free view for contiguous inputs; kernel reads native dtype.
    row_sse = _row_sq_sums(inp.reshape(B, D), tgt.reshape(B, D))

    if weights is not None:
        # PyTorch path requires `classes` to build per-sample weights.
        assert classes is not None, "classes required when weights are set"
        w = jnp.asarray(weights, jnp.float32)[jnp.asarray(classes, jnp.int32)]
        w = w / jnp.sum(w)                      # normalized_weight
    else:
        w = jnp.ones((B,), dtype=jnp.float32)   # plain MSE == weight 1 per row

    loss = jnp.sum(w * row_sse) / jnp.float32(B * D)   # .mean() over B*C*H*W
    return loss * jnp.float32(scale)
    # TODO(synk): dist_sync_on_step / device-placement asserts have no Pallas
    # equivalent (single-device metric); omitted.


if __name__ == "__main__":
    key = jax.random.PRNGKey(0)
    k1, k2, k3, k4 = jax.random.split(key, 4)

    # Shapes consistent with the module's (B, C, H, W) usage.
    B, C, H, W = 2, 4, 16, 16
    x = jax.random.normal(k1, (B, C, H, W), dtype=jnp.float32)
    t = jax.random.normal(k2, (B, C, H, W), dtype=jnp.float32)

    # Deterministic "buffers" from __init__: class weights + scale.
    class_weights = jnp.array([0.25, 0.75, 1.5, 2.0], dtype=jnp.float32)
    classes = [1, 3]          # one class id per batch element
    scale = 2.0

    # Weighted path (weights + classes) and unweighted path (weights=None).
    loss_w = weighted_mse_metric(x, t, weights=class_weights,
                                 classes=classes, scale=scale)
    loss_plain = weighted_mse_metric(x, t, weights=None, scale=scale)
    jax.block_until_ready((loss_w, loss_plain))

    # Pure-JAX reference check.
    w = class_weights[jnp.array(classes)]
    wn = (w / w.sum()).reshape(-1, 1, 1, 1)
    ref_w = jnp.mean(wn * (x - t) ** 2) * scale
    ref_p = jnp.mean((x - t) ** 2) * scale
    assert jnp.allclose(loss_w, ref_w, rtol=1e-5, atol=1e-6), (loss_w, ref_w)
    assert jnp.allclose(loss_plain, ref_p, rtol=1e-5, atol=1e-6), (loss_plain, ref_p)

    # Extra check: ragged shapes exercising the in-kernel tail-column mask and
    # the discarded tail-B rows (D=300 not a multiple of 128, B=3 < TB).
    xr = jax.random.normal(k3, (3, 3, 10, 10), dtype=jnp.float32)
    tr = jax.random.normal(k4, (3, 3, 10, 10), dtype=jnp.float32)
    loss_r = weighted_mse_metric(xr, tr, weights=None, scale=1.0)
    jax.block_until_ready(loss_r)
    ref_r = jnp.mean((xr - tr) ** 2)
    assert jnp.allclose(loss_r, ref_r, rtol=1e-5, atol=1e-6), (loss_r, ref_r)

    print("KERNEL_OK")
</pallas_src>

<mosaic_0001>
module attributes {stable_mosaic.version = 11 : i64} {
  func.func @_wmse_kernel(%arg0: i32, %arg1: i32, %arg2: i32, %arg3: memref<8x1024xf32, #tpu.memory_space<vmem>>, %arg4: memref<8x1024xf32, #tpu.memory_space<vmem>>, %arg5: memref<8x128xf32, #tpu.memory_space<vmem>>, %arg6: memref<8x128xf32, #tpu.memory_space<vmem>>) attributes {dimension_semantics = [#tpu.dimension_semantics<parallel>, #tpu.dimension_semantics<parallel>, #tpu.dimension_semantics<arbitrary>], iteration_bounds = array<i64: 1, 1, 1>, scalar_prefetch = 0 : i64, scratch_operands = 1 : i64, tpu.core_type = #tpu.core_type<tc>, window_params = [{transform_indices = @transform_0, window_bounds = array<i64: 8, 1024>}, {transform_indices = @transform_1, window_bounds = array<i64: 8, 1024>}, {transform_indices = @transform_2, window_bounds = array<i64: 8, 128>}]} {
    %c0_i32 = arith.constant 0 : i32
    %0 = arith.cmpi eq, %arg2, %c0_i32 : i32
    %1 = arith.extui %0 : i1 to i32
    %c0_i32_0 = arith.constant 0 : i32
    %2 = arith.cmpi ne, %1, %c0_i32_0 : i32
    scf.if %2 {
      %cst = arith.constant 0.000000e+00 : f32
      %28 = vector.broadcast %cst : f32 to vector<8x128xf32>
      %c0_10 = arith.constant 0 : index
      %c0_11 = arith.constant 0 : index
      %29 = vector.load %arg6[%c0_10, %c0_11] : memref<8x128xf32, #tpu.memory_space<vmem>>, vector<8x128xf32>
      tpu.vector_store %arg6[%c0_10, %c0_11], %28 {strides = array<i32>} : memref<8x128xf32, #tpu.memory_space<vmem>>, vector<8x128xf32>,
    } else {
    }
    %c0 = arith.constant 0 : index
    %c0_1 = arith.constant 0 : index
    %3 = vector.load %arg3[%c0, %c0_1] : memref<8x1024xf32, #tpu.memory_space<vmem>>, vector<8x1024xf32>
    %c0_2 = arith.constant 0 : index
    %c0_3 = arith.constant 0 : index
    %4 = vector.load %arg4[%c0_2, %c0_3] : memref<8x1024xf32, #tpu.memory_space<vmem>>, vector<8x1024xf32>
    %5 = arith.subf %3, %4 : vector<8x1024xf32>
    %6 = arith.mulf %5, %5 : vector<8x1024xf32>
    %7 = vector.extract_strided_slice %6 {offsets = [0, 0], sizes = [8, 128], strides = [1, 1]} : vector<8x1024xf32> to vector<8x128xf32>
    %8 = vector.extract_strided_slice %6 {offsets = [0, 128], sizes = [8, 128], strides = [1, 1]} : vector<8x1024xf32> to vector<8x128xf32>
    %9 = arith.addf %7, %8 : vector<8x128xf32>
    %10 = vector.extract_strided_slice %6 {offsets = [0, 256], sizes = [8, 128], strides = [1, 1]} : vector<8x1024xf32> to vector<8x128xf32>
    %11 = arith.addf %9, %10 : vector<8x128xf32>
    %12 = vector.extract_strided_slice %6 {offsets = [0, 384], sizes = [8, 128], strides = [1, 1]} : vector<8x1024xf32> to vector<8x128xf32>
    %13 = arith.addf %11, %12 : vector<8x128xf32>
    %14 = vector.extract_strided_slice %6 {offsets = [0, 512], sizes = [8, 128], strides = [1, 1]} : vector<8x1024xf32> to vector<8x128xf32>
    %15 = arith.addf %13, %14 : vector<8x128xf32>
    %16 = vector.extract_strided_slice %6 {offsets = [0, 640], sizes = [8, 128], strides = [1, 1]} : vector<8x1024xf32> to vector<8x128xf32>
    %17 = arith.addf %15, %16 : vector<8x128xf32>
    %18 = vector.extract_strided_slice %6 {offsets = [0, 768], sizes = [8, 128], strides = [1, 1]} : vector<8x1024xf32> to vector<8x128xf32>
    %19 = arith.addf %17, %18 : vector<8x128xf32>
    %20 = vector.extract_strided_slice %6 {offsets = [0, 896], sizes = [8, 128], strides = [1, 1]} : vector<8x1024xf32> to vector<8x128xf32>
    %21 = arith.addf %19, %20 : vector<8x128xf32>
    %c0_4 = arith.constant 0 : index
    %c0_5 = arith.constant 0 : index
    %22 = vector.load %arg6[%c0_4, %c0_5] : memref<8x128xf32, #tpu.memory_space<vmem>>, vector<8x128xf32>
    %23 = arith.addf %22, %21 : vector<8x128xf32>
    %c0_6 = arith.constant 0 : index
    %c0_7 = arith.constant 0 : index
    %24 = vector.load %arg6[%c0_6, %c0_7] : memref<8x128xf32, #tpu.memory_space<vmem>>, vector<8x128xf32>
    tpu.vector_store %arg6[%c0_6, %c0_7], %23 {strides = array<i32>} : memref<8x128xf32, #tpu.memory_space<vmem>>, vector<8x128xf32>,
    %c0_i32_8 = arith.constant 0 : i32
    %25 = arith.cmpi eq, %arg2, %c0_i32_8 : i32
    %26 = arith.extui %25 : i1 to i32
    %c0_i32_9 = arith.constant 0 : i32
    %27 = arith.cmpi ne, %26, %c0_i32_9 : i32
    scf.if %27 {
      %c0_10 = arith.constant 0 : index
      %c0_11 = arith.constant 0 : index
      %28 = vector.load %arg6[%c0_10, %c0_11] : memref<8x128xf32, #tpu.memory_space<vmem>>, vector<8x128xf32>
      %c0_12 = arith.constant 0 : index
      %c0_13 = arith.constant 0 : index
      %29 = vector.load %arg5[%c0_12, %c0_13] : memref<8x128xf32, #tpu.memory_space<vmem>>, vector<8x128xf32>
      tpu.vector_store %arg5[%c0_12, %c0_13], %28 {strides = array<i32>} : memref<8x128xf32, #tpu.memory_space<vmem>>, vector<8x128xf32>,
    } else {
    }
    return
  }
  func.func @transform_0(%arg0: i32, %arg1: i32, %arg2: i32) -> (i32, i32) {
    %c1_i32 = arith.constant 1 : i32
    %0 = arith.muli %arg1, %c1_i32 : i32
    %1 = arith.addi %0, %arg2 : i32
    %c0_i32 = arith.constant 0 : i32
    return %arg0, %1 : i32, i32
  }
  func.func @transform_1(%arg0: i32, %arg1: i32, %arg2: i32) -> (i32, i32) {
    %c1_i32 = arith.constant 1 : i32
    %0 = arith.muli %arg1, %c1_i32 : i32
    %1 = arith.addi %0, %arg2 : i32
    %c0_i32 = arith.constant 0 : i32
    return %arg0, %1 : i32, i32
  }
  func.func @transform_2(%arg0: i32, %arg1: i32, %arg2: i32) -> (i32, i32) {
    %c0_i32 = arith.constant 0 : i32
    return %arg0, %arg1 : i32, i32
  }
}

</mosaic_0001>

<llo_original>
// kernel: tpu_custom_call.1
$region0: #{tpu_custom_call.1}
  #allocation0 [shape = 'u32[]', space=smem, size = 0x4, offset = 0x4, fixed_abs, tag = 'smem constant byte address 0x4 - core index']
  #allocation1 [shape = 'u32[144,128]{1,0:T(1,128)}', space=vmem, size = 0x12000, scoped, tag = 'internal scratch']
  #allocation2 [shape = 'f32[8,128]{1,0:T(8,128)}', space=vmem, size = 0x1000, scoped, tag = 'scratch operand']
  %s0 = inlined_call_operand.hbm [shape: f32[2,1024], index: 0, kind: input, shape index: {}]
  %s1 = inlined_call_operand.hbm [shape: f32[2,1024], index: 1, kind: input, shape index: {}]
  %s2 = inlined_call_operand.hbm [shape: f32[8,128], index: 2, kind: output, shape index: {}]
  %s3 = sld [smem:[#allocation0]]
  $region34: #{tpu_custom_call.1} parent=0
    _
  %s5 = ssub.s32 1, %s3
  %s6 = scalar_select 0, %s5, %s3
  $region1: #{tpu_custom_call.1} parent=0
    #allocation3 [shape = 'u8[32768]{0}', space=vmem, size = 0x8000, scoped, tag = 'input window, operand 0, single buffered']
    #allocation4 [shape = 's32[1]{0}', space=sflag, size = 0x4, scoped, tag = 'scoped memory for tpu_custom_call.1']
    #allocation5 [shape = 's32[1]{0}', space=sflag, size = 0x4, scoped, tag = 'scoped memory for tpu_custom_call.1']
    #allocation6 [shape = 'u8[32768]{0}', space=vmem, size = 0x8000, scoped, tag = 'input window, operand 1, single buffered']
    #allocation7 [shape = 's32[1]{0}', space=sflag, size = 0x4, scoped, tag = 'scoped memory for tpu_custom_call.1']
    #allocation8 [shape = 'u8[4096]{0}', space=vmem, size = 0x1000, scoped, tag = 'output window, operand 0, single buffered']
    %7 = vsyncpa [#allocation4], 0
    %8 = vsyncpa [#allocation7], 0
    %9 = vsyncpa [#allocation5], 0
    // Predicated region
    $region2: #{tpu_custom_call.1} parent=1 // pred_check
      _
    $region3: #{tpu_custom_call.1} parent=1 // pred_check_branch
      %11 = sbr.rel (0) target = $region5
    $region4: #{tpu_custom_call.1} parent=1 // pred_region
      %s12 = sadd.s32 0, 0
      %s13 = smul.u32 8, %s12
      %s15 = ssub.s32 1024, 256
      %16 = vsyncadd [#allocation4], %s15
      %s17 = smul.addr %s13, 32
      %s18 = scalar_lea.hbm %s0, %s17
      %s19 = sshll.u32 [#allocation3], 4
      %s20 = int_to_ptr.vmem [resolvable:$true] %s19
      %25 = dma.hbm_to_vmem [thread:$0]  %s18, 256, %s20, [#allocation4], 256, 256, 16
    $region5: #{tpu_custom_call.1} parent=1 // pred_fallthru
      _
    // Predicated region
    $region6: #{tpu_custom_call.1} parent=1 // pred_check
      _
    $region7: #{tpu_custom_call.1} parent=1 // pred_check_branch
      %27 = sbr.rel (0) target = $region9
    $region8: #{tpu_custom_call.1} parent=1 // pred_region
      %s28 = sadd.s32 0, 0
      %s29 = smul.u32 8, %s28
      %s31 = ssub.s32 1024, 256
      %32 = vsyncadd [#allocation7], %s31
      %s33 = smul.addr %s29, 32
      %s34 = scalar_lea.hbm %s1, %s33
      %s35 = sshll.u32 [#allocation6], 4
      %s36 = int_to_ptr.vmem [resolvable:$true] %s35
      %41 = dma.hbm_to_vmem [thread:$0]  %s34, 256, %s36, [#allocation7], 256, 256, 16
    $region9: #{tpu_custom_call.1} parent=1 // pred_fallthru
      _
    // Predicated region
    $region10: #{tpu_custom_call.1} parent=1 // pred_check
      _
    $region11: #{tpu_custom_call.1} parent=1 // pred_check_branch
      %43 = sbr.rel (0) target = $region13
    $region12: #{tpu_custom_call.1} parent=1 // pred_region
      %44 = dma.done [#allocation4], 1024
    $region13: #{tpu_custom_call.1} parent=1 // pred_fallthru
      _
    // Predicated region
    $region14: #{tpu_custom_call.1} parent=1 // pred_check
      _
    $region15: #{tpu_custom_call.1} parent=1 // pred_check_branch
      %46 = sbr.rel (0) target = $region17
    $region16: #{tpu_custom_call.1} parent=1 // pred_region
      %47 = dma.done [#allocation7], 1024
    $region17: #{tpu_custom_call.1} parent=1 // pred_fallthru
      _
    %s48 = sadd.s32 0, 0
    %s49 = smul.u32 8, %s48
    %s50 = sadd.s32 0, 0
    %s51 = smul.u32 8, %s50
    %p52 = scmp.eq.s32.totalorder 0, 0
    // Predicated region
    $region18: #{tpu_custom_call.1} parent=1 // pred_check
      %p53 = pneg %p52
    $region19: #{tpu_custom_call.1} parent=1 // pred_check_branch
      %55 = sbr.rel (%p53) target = $region21
    $region20: #{tpu_custom_call.1} parent=1 // pred_region
      %56 = vst [vmem:[#allocation2] sm:$0xff] 0.0
    $region21: #{tpu_custom_call.1} parent=1 // pred_fallthru
      _
    %v57 = vld [vmem:[#allocation3] sm:$0xff]
    %v58 = vld [vmem:[#allocation3 + $0x8] sm:$0xff]
    %v59 = vld [vmem:[#allocation3 + $0x10] sm:$0xff]
    %v60 = vld [vmem:[#allocation3 + $0x18] sm:$0xff]
    %v61 = vld [vmem:[#allocation3 + $0x20] sm:$0xff]
    %v62 = vld [vmem:[#allocation3 + $0x28] sm:$0xff]
    %v63 = vld [vmem:[#allocation3 + $0x30] sm:$0xff]
    %v64 = vld [vmem:[#allocation3 + $0x38] sm:$0xff]
    %v65 = vld [vmem:[#allocation6] sm:$0xff]
    %v66 = vld [vmem:[#allocation6 + $0x8] sm:$0xff]
    %v67 = vld [vmem:[#allocation6 + $0x10] sm:$0xff]
    %v68 = vld [vmem:[#allocation6 + $0x18] sm:$0xff]
    %v69 = vld [vmem:[#allocation6 + $0x20] sm:$0xff]
    %v70 = vld [vmem:[#allocation6 + $0x28] sm:$0xff]
    %v71 = vld [vmem:[#allocation6 + $0x30] sm:$0xff]
    %v72 = vld [vmem:[#allocation6 + $0x38] sm:$0xff]
    %v73 = vsub.f32 %v57, %v65
    %v74 = vsub.f32 %v58, %v66
    %v75 = vsub.f32 %v59, %v67
    %v76 = vsub.f32 %v60, %v68
    %v77 = vsub.f32 %v61, %v69
    %v78 = vsub.f32 %v62, %v70
    %v79 = vsub.f32 %v63, %v71
    %v80 = vsub.f32 %v64, %v72
    %v81 = vmul.f32 %v73, %v73
    %v82 = vmul.f32 %v74, %v74
    %v83 = vmul.f32 %v75, %v75
    %v84 = vmul.f32 %v76, %v76
    %v85 = vmul.f32 %v77, %v77
    %v86 = vmul.f32 %v78, %v78
    %v87 = vmul.f32 %v79, %v79
    %v88 = vmul.f32 %v80, %v80
    %v93 = vrot.slane %v81, 2
    %v94 = vrot.slane %v83, 2
    %v95 = vrot.slane %v85, 2
    %v96 = vrot.slane %v87, 2
    %v101 = vadd.f32 %v81, %v93
    %v102 = vadd.f32 %v83, %v94
    %v103 = vadd.f32 %v85, %v95
    %v104 = vadd.f32 %v87, %v96
    %v105 = vrot.slane %v81, 4
    %v106 = vrot.slane %v83, 4
    %v107 = vrot.slane %v85, 4
    %v108 = vrot.slane %v87, 4
    %v113 = vadd.f32 %v101, %v105
    %v114 = vadd.f32 %v102, %v106
    %v115 = vadd.f32 %v103, %v107
    %v116 = vadd.f32 %v104, %v108
    %v117 = vrot.slane %v81, 6
    %v118 = vrot.slane %v83, 6
    %v119 = vrot.slane %v85, 6
    %v120 = vrot.slane %v87, 6
    %v125 = vadd.f32 %v113, %v117
    %v126 = vadd.f32 %v114, %v118
    %v127 = vadd.f32 %v115, %v119
    %v128 = vadd.f32 %v116, %v120
    %v129 = vadd.f32 %v125, %v82
    %v130 = vadd.f32 %v126, %v84
    %v131 = vadd.f32 %v127, %v86
    %v132 = vadd.f32 %v128, %v88
    %v137 = vrot.slane %v82, 2
    %v138 = vrot.slane %v84, 2
    %v139 = vrot.slane %v86, 2
    %v140 = vrot.slane %v88, 2
    %v145 = vadd.f32 %v129, %v137
    %v146 = vadd.f32 %v130, %v138
    %v147 = vadd.f32 %v131, %v139
    %v148 = vadd.f32 %v132, %v140
    %v149 = vrot.slane %v82, 4
    %v150 = vrot.slane %v84, 4
    %v151 = vrot.slane %v86, 4
    %v152 = vrot.slane %v88, 4
    %v157 = vadd.f32 %v145, %v149
    %v158 = vadd.f32 %v146, %v150
    %v159 = vadd.f32 %v147, %v151
    %v160 = vadd.f32 %v148, %v152
    %v161 = vrot.slane %v82, 6
    %v162 = vrot.slane %v84, 6
    %v163 = vrot.slane %v86, 6
    %v164 = vrot.slane %v88, 6
    %v169 = vadd.f32 %v157, %v161
    %v170 = vadd.f32 %v158, %v162
    %v171 = vadd.f32 %v159, %v163
    %v172 = vadd.f32 %v160, %v164
    %v173 = vld [vmem:[#allocation2] sm:$0xff]
    %v178 = vcombine.low %v169, %v170
    %v179 = vcombine.low %v171, %v172
    %v181 = vunpack.c.l.s4 1983009808
    %v182 = vunpack.c.0.s8 %v181
    %v183 = vlaneseq
    %v184 = vshrl.u32 %v183, 7
    %v185 = vsub.s32 %v182, %v184
    %v186 = vrot.slane %v178, %v185
    %v188 = vunpack.c.l.s4 1983009808
    %v189 = vunpack.c.0.s8 %v188
    %v190 = vlaneseq
    %v191 = vshrl.u32 %v190, 7
    %v192 = vsub.s32 %v189, %v191
    %v193 = vrot.slane %v179, %v192
    %v194 = vcombine.low %v186, %v193
    %v196 = vadd.f32 %v173, %v194
    %197 = vst [vmem:[#allocation2] sm:$0xff] %v196
    // Predicated region
    $region22: #{tpu_custom_call.1} parent=1 // pred_check
      %p198 = pneg %p52
    $region23: #{tpu_custom_call.1} parent=1 // pred_check_branch
      %200 = sbr.rel (%p198) target = $region25
    $region24: #{tpu_custom_call.1} parent=1 // pred_region
      %v201 = vld [vmem:[#allocation2] sm:$0xff]
      %202 = vst [vmem:[#allocation8] sm:$0xff] %v201
    $region25: #{tpu_custom_call.1} parent=1 // pred_fallthru
      _
    // Predicated region
    $region26: #{tpu_custom_call.1} parent=1 // pred_check
      _
    $region27: #{tpu_custom_call.1} parent=1 // pred_check_branch
      %204 = sbr.rel (0) target = $region29
    $region28: #{tpu_custom_call.1} parent=1 // pred_region
      %s206 = ssub.s32 128, 128
      %207 = vsyncadd [#allocation5], %s206
      %s209 = sshll.u32 [#allocation8], 4
      %s210 = int_to_ptr.vmem [resolvable:$true] %s209
      %212 = dma.vmem_to_hbm [thread:$0]  %s210, 128, %s2, [#allocation5]
    $region29: #{tpu_custom_call.1} parent=1 // pred_fallthru
      _
    // Predicated region
    $region30: #{tpu_custom_call.1} parent=1 // pred_check
      _
    $region31: #{tpu_custom_call.1} parent=1 // pred_check_branch
      %214 = sbr.rel (0) target = $region33
    $region32: #{tpu_custom_call.1} parent=1 // pred_region
      %215 = dma.done [#allocation5], 128
    $region33: #{tpu_custom_call.1} parent=1 // pred_fallthru
      _
    %216 = vsyncpa [#allocation4], 1
    %217 = vsyncpa [#allocation7], 1
    %218 = vsyncpa [#allocation5], 1

</llo_original>
